<compile_context>
chip_gen: v7x
topology: tpu7x:2x2x1
jax: 0.10.0
libtpu: 0.0.40
codegen_flags: <defaults>
</compile_context>

<pallas_src>
import functools
import math

import jax
import jax.numpy as jnp
from jax import lax
from jax.experimental import pallas as pl
from jax.experimental.pallas import tpu as pltpu


def _round_up(x, m):
    return ((x + m - 1) // m) * m


def _sublane_multiple(dtype):
    # Minimum sublane tile by element size (f32: 8, bf16: 16, fp8/int8: 32).
    return {4: 8, 2: 16, 1: 32}[jnp.dtype(dtype).itemsize]


def _device_kind():
    try:
        return jax.devices()[0].device_kind.lower()
    except Exception:
        return ""


def _default_max_tile():
    kind = _device_kind()
    # v5e (and older) MXU is 4x128^2 -> 128-wide tiles already fill it and the
    # kernel there is HBM-bound; v6e / v7x have 2x256^2 MXUs -> 256 tiles.
    if any(t in kind for t in ("v2", "v3", "v4", "v5")):
        return 128
    return 256


def _default_vmem_limit():
    kind = _device_kind()
    if "v7" in kind:
        return 48 * 1024 * 1024   # v7x: 64 MiB physical per TC, keep headroom
    if "v6" in kind:
        return 64 * 1024 * 1024   # v6e: 128 MiB physical
    return 32 * 1024 * 1024       # v5e and default: plenty for this footprint


# ----------------------------------------------------------------------------
# Pass 1: Q/K/V projections (once per token), scale folded into Q.
# ----------------------------------------------------------------------------
def _qkv_proj_kernel(x_ref, wq_ref, wk_ref, wv_ref, q_ref, k_ref, v_ref, *,
                     scale, mxu_dtype):
    x = x_ref[0]                                           # (tile, dq)
    if mxu_dtype is not None and x.dtype != jnp.dtype(mxu_dtype):
        x = x.astype(mxu_dtype)                            # once per tile only
    q = jnp.dot(x, wq_ref[...], preferred_element_type=jnp.float32)
    k = jnp.dot(x, wk_ref[...], preferred_element_type=jnp.float32)
    v = jnp.dot(x, wv_ref[...], preferred_element_type=jnp.float32)
    q_ref[0] = (q * scale).astype(q_ref.dtype)             # fold 1/sqrt(dk)
    k_ref[0] = k.astype(k_ref.dtype)
    v_ref[0] = v.astype(v_ref.dtype)


# ----------------------------------------------------------------------------
# Pass 2: flash attention with online softmax over precomputed q/k/v.
# ----------------------------------------------------------------------------
def _flash_attention_kernel(q_ref, k_ref, v_ref, o_ref,
                            m_scratch, l_scratch, acc_scratch, *,
                            seq_len, tkv, mask_kv, approx_recip):
    j = pl.program_id(2)                 # kv-tile index (reduction axis)
    nkv = pl.num_programs(2)

    @pl.when(j == 0)
    def _init():
        m_scratch[...] = jnp.full(m_scratch.shape, -jnp.inf, jnp.float32)
        l_scratch[...] = jnp.zeros(l_scratch.shape, jnp.float32)
        acc_scratch[...] = jnp.zeros(acc_scratch.shape, jnp.float32)

    q = q_ref[0]                         # (tq, dk), already scaled
    k = k_ref[0]                         # (tkv, dk)
    v = v_ref[0]                         # (tkv, dv)

    # QK^T: contract the feature dim directly — no explicit K transpose (XLU).
    s = lax.dot_general(q, k, dimension_numbers=(((1,), (1,)), ((), ())),
                        preferred_element_type=jnp.float32)   # (tq, tkv)

    if mask_kv:
        # Padded sequence rows beyond seq_len must not contribute to softmax.
        # (Every kv tile keeps >= 1 valid row since n_pad - N < tkv, so no
        #  all-(-inf) rows / NaNs can appear.)
        kv_idx = j * tkv + lax.broadcasted_iota(jnp.int32, s.shape, 1)
        s = jnp.where(kv_idx < seq_len, s, -jnp.inf)

    # Online softmax update.
    m_prev = m_scratch[...]
    m_new = jnp.maximum(m_prev, jnp.max(s, axis=-1, keepdims=True))
    alpha = jnp.exp(m_prev - m_new)
    p = jnp.exp(s - m_new)
    l_scratch[...] = alpha * l_scratch[...] + jnp.sum(p, axis=-1, keepdims=True)
    acc_scratch[...] = alpha * acc_scratch[...] + jnp.dot(
        p.astype(v.dtype), v, preferred_element_type=jnp.float32)
    m_scratch[...] = m_new

    @pl.when(j == nkv - 1)
    def _finalize():
        inv_l = pl.reciprocal(l_scratch[...], approx=approx_recip)  # (tq, 1)
        o_ref[0] = (acc_scratch[...] * inv_l).astype(o_ref.dtype)


def self_attention(x, wq, wk, wv, *, mxu_dtype=None, approx_recip=True,
                   max_tile=None, kv_buffers=2):
    """x: (B, N, dq); wq/wk: (dq, dk); wv: (dq, dv). Returns (B, N, dv).

    mxu_dtype: None -> f32 MXU inputs; jnp.bfloat16 recommended on v5e;
               a float8 dtype is valid MXU input on v7x (accumulation is f32).
    kv_buffers: >2 enables deeper kv-stream pipelining (pl.Buffered).
    """
    B, N, dq = x.shape
    dq_w, dk = wq.shape
    assert dq_w == dq
    dv = wv.shape[1]
    scale = 1.0 / math.sqrt(dk)
    out_dtype = x.dtype

    qkv_dtype = jnp.dtype(mxu_dtype) if mxu_dtype is not None else jnp.float32

    if max_tile is None:
        max_tile = _default_max_tile()
    vmem_limit = _default_vmem_limit()

    # Sequence tile (same for q and kv): respect the minimum sublane tile of
    # every dtype touching a (seq, feature) block.
    sub = max(_sublane_multiple(out_dtype), _sublane_multiple(qkv_dtype),
              _sublane_multiple(x.dtype))
    tile = _round_up(min(N, max_tile), sub)
    tq = tkv = tile
    n_pad = _round_up(N, tile)

    # Only the sequence dim is padded; feature dims stay un-padded (full-dim
    # BlockSpec exception) and x keeps its native dtype.
    x_p = x if n_pad == N else jnp.pad(x, ((0, 0), (0, n_pad - N), (0, 0)))

    # Cast weights once wrapper-side (no per-step VPU casts inside the loop).
    wq_c = wq.astype(qkv_dtype)
    wk_c = wk.astype(qkv_dtype)
    wv_c = wv.astype(qkv_dtype)

    # ---------------- Pass 1: projections (once per token) ------------------
    proj_kernel = functools.partial(_qkv_proj_kernel, scale=scale,
                                    mxu_dtype=mxu_dtype)
    q, k, v = pl.pallas_call(
        proj_kernel,
        out_shape=(jax.ShapeDtypeStruct((B, n_pad, dk), qkv_dtype),
                   jax.ShapeDtypeStruct((B, n_pad, dk), qkv_dtype),
                   jax.ShapeDtypeStruct((B, n_pad, dv), qkv_dtype)),
        grid_spec=pltpu.PrefetchScalarGridSpec(
            num_scalar_prefetch=0,
            grid=(B, n_pad // tile),
            in_specs=[
                pl.BlockSpec((1, tile, dq), lambda b, i: (b, i, 0)),
                pl.BlockSpec((dq, dk), lambda b, i: (0, 0)),
                pl.BlockSpec((dq, dk), lambda b, i: (0, 0)),
                pl.BlockSpec((dq, dv), lambda b, i: (0, 0)),
            ],
            out_specs=[
                pl.BlockSpec((1, tile, dk), lambda b, i: (b, i, 0)),
                pl.BlockSpec((1, tile, dk), lambda b, i: (b, i, 0)),
                pl.BlockSpec((1, tile, dv), lambda b, i: (b, i, 0)),
            ],
        ),
        compiler_params=pltpu.CompilerParams(
            dimension_semantics=("parallel", "parallel"),
            vmem_limit_bytes=vmem_limit),
    )(x_p, wq_c, wk_c, wv_c)

    # ---------------- Pass 2: flash attention -------------------------------
    def kv_block_spec(shape, index_map):
        if kv_buffers and kv_buffers > 2:
            return pl.BlockSpec(shape, index_map,
                                pipeline_mode=pl.Buffered(kv_buffers))
        return pl.BlockSpec(shape, index_map)

    flash_kernel = functools.partial(
        _flash_attention_kernel, seq_len=N, tkv=tkv, mask_kv=(n_pad != N),
        approx_recip=approx_recip)

    out = pl.pallas_call(
        flash_kernel,
        out_shape=jax.ShapeDtypeStruct((B, n_pad, dv), out_dtype),
        grid_spec=pltpu.PrefetchScalarGridSpec(
            num_scalar_prefetch=0,
            grid=(B, n_pad // tq, n_pad // tkv),
            in_specs=[
                pl.BlockSpec((1, tq, dk), lambda b, i, j: (b, i, 0)),
                kv_block_spec((1, tkv, dk), lambda b, i, j: (b, j, 0)),
                kv_block_spec((1, tkv, dv), lambda b, i, j: (b, j, 0)),
            ],
            out_specs=pl.BlockSpec((1, tq, dv), lambda b, i, j: (b, i, 0)),
            scratch_shapes=[
                pltpu.VMEM((tq, 1), jnp.float32),    # running max m
                pltpu.VMEM((tq, 1), jnp.float32),    # running sum l
                pltpu.VMEM((tq, dv), jnp.float32),   # output accumulator
            ],
        ),
        compiler_params=pltpu.CompilerParams(
            dimension_semantics=("parallel", "parallel", "arbitrary"),
            vmem_limit_bytes=vmem_limit),
    )(q, k, v)

    # Strip sequence padding only (output is already in the caller's dtype and
    # has no feature padding).
    return out[:, :N, :] if n_pad != N else out


def self_attention_ref(x, wq, wk, wv):
    q = x @ wq
    k = x @ wk
    v = x @ wv
    dist = jnp.einsum("bnk,bmk->bnm", q, k) / math.sqrt(wq.shape[1])
    p = jax.nn.softmax(dist, axis=-1)
    return jnp.einsum("bnm,bmv->bnv", p, v)


if __name__ == "__main__":
    # Shapes from the PyTorch spec.
    dim_embedding = 6   # dim_q
    dim_QK = 7          # dim_k
    dim_V = 8           # dim_v
    batch_size = 3
    sequence_length = 4

    key = jax.random.PRNGKey(0)
    kx, kq, kk, kv = jax.random.split(key, 4)

    x = jax.random.normal(kx, (batch_size, sequence_length, dim_embedding),
                          dtype=jnp.float32)

    # nn.Linear(dim_q, dim_k, bias=False): weight (dim_k, dim_q), uniform in
    # (-1/sqrt(dim_q), 1/sqrt(dim_q)); stored transposed as (dim_q, dim_k) so
    # the kernel computes x @ W.
    bound = 1.0 / math.sqrt(dim_embedding)
    wq = jax.random.uniform(kq, (dim_embedding, dim_QK),
                            minval=-bound, maxval=bound, dtype=jnp.float32)
    wk = jax.random.uniform(kk, (dim_embedding, dim_QK),
                            minval=-bound, maxval=bound, dtype=jnp.float32)
    wv = jax.random.uniform(kv, (dim_embedding, dim_V),
                            minval=-bound, maxval=bound, dtype=jnp.float32)

    ref = self_attention_ref(x, wq, wk, wv)

    # Exact path: f32 MXU inputs + exact reciprocal -> tight tolerance.
    att = self_attention(x, wq, wk, wv, mxu_dtype=None, approx_recip=False)
    jax.block_until_ready(att)
    assert att.shape == (batch_size, sequence_length, dim_V)
    assert jnp.allclose(att, ref, atol=1e-5, rtol=1e-5), "f32 path mismatch"

    # Fast path: bf16 MXU inputs (f32 accumulation) + EUP approx reciprocal.
    att_fast = self_attention(x, wq, wk, wv, mxu_dtype=jnp.bfloat16,
                              approx_recip=True)
    jax.block_until_ready(att_fast)
    assert jnp.allclose(att_fast, ref, atol=2e-2, rtol=2e-2), "bf16 path mismatch"

    # Multi-tile / masked-kv path (force small tiles so the online-softmax
    # reduction and the sequence-padding mask are exercised on every device).
    xb = jax.random.normal(jax.random.PRNGKey(1), (2, 200, dim_embedding),
                           dtype=jnp.float32)
    ref_b = self_attention_ref(xb, wq, wk, wv)
    att_b = self_attention(xb, wq, wk, wv, mxu_dtype=None, approx_recip=False,
                           max_tile=64)
    jax.block_until_ready(att_b)
    assert jnp.allclose(att_b, ref_b, atol=1e-4, rtol=1e-4), "tiled path mismatch"

    print("KERNEL_OK")
</pallas_src>

<mosaic_0001>
module attributes {stable_mosaic.version = 11 : i64} {
  func.func @_qkv_proj_kernel(%arg0: i32, %arg1: i32, %arg2: memref<1x8x6xf32, #tpu.memory_space<vmem>>, %arg3: memref<6x7xf32, #tpu.memory_space<vmem>>, %arg4: memref<6x7xf32, #tpu.memory_space<vmem>>, %arg5: memref<6x8xf32, #tpu.memory_space<vmem>>, %arg6: memref<1x8x7xf32, #tpu.memory_space<vmem>>, %arg7: memref<1x8x7xf32, #tpu.memory_space<vmem>>, %arg8: memref<1x8x8xf32, #tpu.memory_space<vmem>>) attributes {dimension_semantics = [#tpu.dimension_semantics<parallel>, #tpu.dimension_semantics<parallel>], iteration_bounds = array<i64: 3, 1>, scalar_prefetch = 0 : i64, scratch_operands = 0 : i64, tpu.core_type = #tpu.core_type<tc>, window_params = [{transform_indices = @transform_0, window_bounds = array<i64: 1, 8, 6>}, {pipeline_mode = #tpu.pipeline_mode<synchronous>, transform_indices = @transform_1, window_bounds = array<i64: 6, 7>}, {pipeline_mode = #tpu.pipeline_mode<synchronous>, transform_indices = @transform_2, window_bounds = array<i64: 6, 7>}, {pipeline_mode = #tpu.pipeline_mode<synchronous>, transform_indices = @transform_3, window_bounds = array<i64: 6, 8>}, {transform_indices = @transform_4, window_bounds = array<i64: 1, 8, 7>}, {transform_indices = @transform_5, window_bounds = array<i64: 1, 8, 7>}, {transform_indices = @transform_6, window_bounds = array<i64: 1, 8, 8>}]} {
    %c0 = arith.constant 0 : index
    %c0_0 = arith.constant 0 : index
    %c0_1 = arith.constant 0 : index
    %0 = vector.load %arg2[%c0, %c0_0, %c0_1] : memref<1x8x6xf32, #tpu.memory_space<vmem>>, vector<1x8x6xf32>
    %1 = vector.shape_cast %0 : vector<1x8x6xf32> to vector<8x6xf32>
    %c0_2 = arith.constant 0 : index
    %c0_3 = arith.constant 0 : index
    %2 = vector.load %arg3[%c0_2, %c0_3] : memref<6x7xf32, #tpu.memory_space<vmem>>, vector<6x7xf32>
    %cst = arith.constant dense<0.000000e+00> : vector<8x7xf32>
    %3 = tpu.matmul %1, %2, %cst {dimension_numbers = #tpu.dot_dimension_numbers<[1], [0], [0], [1], [0, 0, 1, 1], [], []>} : vector<8x6xf32>, vector<6x7xf32>, vector<8x7xf32> -> vector<8x7xf32>
    %c0_4 = arith.constant 0 : index
    %c0_5 = arith.constant 0 : index
    %4 = vector.load %arg4[%c0_4, %c0_5] : memref<6x7xf32, #tpu.memory_space<vmem>>, vector<6x7xf32>
    %cst_6 = arith.constant dense<0.000000e+00> : vector<8x7xf32>
    %5 = tpu.matmul %1, %4, %cst_6 {dimension_numbers = #tpu.dot_dimension_numbers<[1], [0], [0], [1], [0, 0, 1, 1], [], []>} : vector<8x6xf32>, vector<6x7xf32>, vector<8x7xf32> -> vector<8x7xf32>
    %c0_7 = arith.constant 0 : index
    %c0_8 = arith.constant 0 : index
    %6 = vector.load %arg5[%c0_7, %c0_8] : memref<6x8xf32, #tpu.memory_space<vmem>>, vector<6x8xf32>
    %cst_9 = arith.constant dense<0.000000e+00> : vector<8x8xf32>
    %7 = tpu.matmul %1, %6, %cst_9 {dimension_numbers = #tpu.dot_dimension_numbers<[1], [0], [0], [1], [0, 0, 1, 1], [], []>} : vector<8x6xf32>, vector<6x8xf32>, vector<8x8xf32> -> vector<8x8xf32>
    %cst_10 = arith.constant 0.377964467 : f32
    %8 = vector.broadcast %cst_10 : f32 to vector<8x7xf32>
    %9 = arith.mulf %3, %8 : vector<8x7xf32>
    %c0_11 = arith.constant 0 : index
    %c0_12 = arith.constant 0 : index
    %c0_13 = arith.constant 0 : index
    %10 = vector.load %arg6[%c0_11, %c0_12, %c0_13] : memref<1x8x7xf32, #tpu.memory_space<vmem>>, vector<1x8x7xf32>
    %11 = vector.shape_cast %10 : vector<1x8x7xf32> to vector<8x7xf32>
    %12 = vector.shape_cast %9 : vector<8x7xf32> to vector<1x8x7xf32>
    tpu.vector_store %arg6[%c0_11, %c0_12, %c0_13], %12 {strides = array<i32>} : memref<1x8x7xf32, #tpu.memory_space<vmem>>, vector<1x8x7xf32>,
    %c0_14 = arith.constant 0 : index
    %c0_15 = arith.constant 0 : index
    %c0_16 = arith.constant 0 : index
    %13 = vector.load %arg7[%c0_14, %c0_15, %c0_16] : memref<1x8x7xf32, #tpu.memory_space<vmem>>, vector<1x8x7xf32>
    %14 = vector.shape_cast %13 : vector<1x8x7xf32> to vector<8x7xf32>
    %15 = vector.shape_cast %5 : vector<8x7xf32> to vector<1x8x7xf32>
    tpu.vector_store %arg7[%c0_14, %c0_15, %c0_16], %15 {strides = array<i32>} : memref<1x8x7xf32, #tpu.memory_space<vmem>>, vector<1x8x7xf32>,
    %c0_17 = arith.constant 0 : index
    %c0_18 = arith.constant 0 : index
    %c0_19 = arith.constant 0 : index
    %16 = vector.load %arg8[%c0_17, %c0_18, %c0_19] : memref<1x8x8xf32, #tpu.memory_space<vmem>>, vector<1x8x8xf32>
    %17 = vector.shape_cast %16 : vector<1x8x8xf32> to vector<8x8xf32>
    %18 = vector.shape_cast %7 : vector<8x8xf32> to vector<1x8x8xf32>
    tpu.vector_store %arg8[%c0_17, %c0_18, %c0_19], %18 {strides = array<i32>} : memref<1x8x8xf32, #tpu.memory_space<vmem>>, vector<1x8x8xf32>,
    return
  }
  func.func @transform_0(%arg0: i32, %arg1: i32) -> (i32, i32, i32) {
    %c0_i32 = arith.constant 0 : i32
    %c0_i32_0 = arith.constant 0 : i32
    return %arg0, %arg1, %c0_i32 : i32, i32, i32
  }
  func.func @transform_1(%arg0: i32, %arg1: i32) -> (i32, i32) {
    %c0_i32 = arith.constant 0 : i32
    %c0_i32_0 = arith.constant 0 : i32
    %c0_i32_1 = arith.constant 0 : i32
    return %c0_i32, %c0_i32_0 : i32, i32
  }
  func.func @transform_2(%arg0: i32, %arg1: i32) -> (i32, i32) {
    %c0_i32 = arith.constant 0 : i32
    %c0_i32_0 = arith.constant 0 : i32
    %c0_i32_1 = arith.constant 0 : i32
    return %c0_i32, %c0_i32_0 : i32, i32
  }
  func.func @transform_3(%arg0: i32, %arg1: i32) -> (i32, i32) {
    %c0_i32 = arith.constant 0 : i32
    %c0_i32_0 = arith.constant 0 : i32
    %c0_i32_1 = arith.constant 0 : i32
    return %c0_i32, %c0_i32_0 : i32, i32
  }
  func.func @transform_4(%arg0: i32, %arg1: i32) -> (i32, i32, i32) {
    %c0_i32 = arith.constant 0 : i32
    %c0_i32_0 = arith.constant 0 : i32
    return %arg0, %arg1, %c0_i32 : i32, i32, i32
  }
  func.func @transform_5(%arg0: i32, %arg1: i32) -> (i32, i32, i32) {
    %c0_i32 = arith.constant 0 : i32
    %c0_i32_0 = arith.constant 0 : i32
    return %arg0, %arg1, %c0_i32 : i32, i32, i32
  }
  func.func @transform_6(%arg0: i32, %arg1: i32) -> (i32, i32, i32) {
    %c0_i32 = arith.constant 0 : i32
    %c0_i32_0 = arith.constant 0 : i32
    return %arg0, %arg1, %c0_i32 : i32, i32, i32
  }
}

</mosaic_0001>

<llo_original>
// kernel: tpu_custom_call.1
$region0: #{tpu_custom_call.1}
  #allocation0 [shape = 'u32[]', space=smem, size = 0x4, offset = 0x4, fixed_abs, tag = 'smem constant byte address 0x4 - core index']
  #allocation1 [shape = 'u32[144,128]{1,0:T(1,128)}', space=vmem, size = 0x12000, scoped, tag = 'internal scratch']
  %s0 = inlined_call_operand.hbm [shape: f32[3,8,6], index: 0, kind: input, shape index: {}]
  %s1 = inlined_call_operand.hbm [shape: f32[6,7], index: 1, kind: input, shape index: {}]
  %s2 = inlined_call_operand.hbm [shape: f32[6,7], index: 2, kind: input, shape index: {}]
  %s3 = inlined_call_operand.vmem [shape: f32[6,8], index: 3, kind: input, shape index: {}]
  %s4 = inlined_call_operand.hbm [shape: f32[3,8,7], index: 4, kind: output, shape index: {0}]
  %s5 = inlined_call_operand.hbm [shape: f32[3,8,7], index: 5, kind: output, shape index: {1}]
  %s6 = inlined_call_operand.hbm [shape: f32[3,8,8], index: 6, kind: output, shape index: {2}]
  %7 = xla_tuple %s4, %s5, %s6
  %s8 = sld [smem:[#allocation0]]
  $region77: #{tpu_custom_call.1} parent=0
    _
  %s10 = ssub.s32 1, %s8
  %s11 = scalar_select 0, %s10, %s8
  $region1: #{tpu_custom_call.1} parent=0
    #allocation2 [shape = 'u8[8192]{0}', space=vmem, size = 0x2000, scoped, tag = 'input window, operand 0']
    #allocation3 [shape = 's32[2]{0}', space=sflag, size = 0x8, scoped, tag = 'scoped memory for tpu_custom_call.1']
    #allocation4 [shape = 's32[2]{0}', space=sflag, size = 0x8, scoped, tag = 'scoped memory for tpu_custom_call.1']
    #allocation5 [shape = 'u8[4096]{0}', space=vmem, size = 0x1000, scoped, tag = 'input window, operand 1, single buffered']
    #allocation6 [shape = 's32[1]{0}', space=sflag, size = 0x4, scoped, tag = 'scoped memory for tpu_custom_call.1']
    #allocation7 [shape = 'u8[4096]{0}', space=vmem, size = 0x1000, scoped, tag = 'input window, operand 2, single buffered']
    #allocation8 [shape = 'u8[8192]{0}', space=vmem, size = 0x2000, scoped, tag = 'output window, operand 0']
    #allocation9 [shape = 'u8[8192]{0}', space=vmem, size = 0x2000, scoped, tag = 'output window, operand 1']
    #allocation10 [shape = 's32[2]{0}', space=sflag, size = 0x8, scoped, tag = 'scoped memory for tpu_custom_call.1']
    #allocation11 [shape = 'u8[8192]{0}', space=vmem, size = 0x2000, scoped, tag = 'output window, operand 2']
    %12 = vsyncpa [#allocation3], 0
    %s13 = scalar_lea.sflag [#allocation3], 1
    %14 = vsyncpa %s13, 0
    %15 = vsyncpa [#allocation6], 0
    %16 = vsyncpa [#allocation4], 0
    %s17 = scalar_lea.sflag [#allocation4], 1
    %18 = vsyncpa %s17, 0
    %19 = vsyncpa [#allocation10], 0
    %s20 = scalar_lea.sflag [#allocation10], 1
    %21 = vsyncpa %s20, 0
    loop: start=0, step=1, limit=5
    $region2: #{tpu_custom_call.1} parent=1 // loop_pre_header
      _
    $region3: #{tpu_custom_call.1} parent=1 // loop_header
      %s23 = sphi 0, %s27
      %p24 = scmp.ge.s32.totalorder %s23, 5
      %s30 = sphi 0, %s42
      %s31 = sphi 0, %s38
      %s32 = sphi 0, %s30
      %s33 = sphi 0, %s31
      %s34 = sphi 0, %s32
      %s35 = sphi 0, %s33
      %s47 = sphi 0, %s49
      %s50 = sphi 0, %s47
      %s51 = sphi 0, %s50
      %s67 = sphi 0, %s51
      %s71 = sphi 0, %s71
      %s73 = sphi 0, %s71
      %s74 = sphi 0, %s73
      %s88 = sphi 0, %s74
      %s92 = sphi 0, %s92
      %s94 = sphi 0, %s92
      %s95 = sphi 0, %s94
      %s109 = sphi 0, %s95
      %s113 = sphi 0, %s113
      %s115 = sphi 0, %s113
      %s116 = sphi 0, %s115
      %s130 = sphi 0, %s116
      %s138 = sphi 0, %s140
      %s141 = sphi 0, %s138
      %s142 = sphi 0, %s141
      %s158 = sphi 0, %s142
      %s166 = sphi 0, %s168
      %s169 = sphi 0, %s166
      %s170 = sphi 0, %s169
      %s186 = sphi 0, %s170
      %s194 = sphi 0, %s196
      %s197 = sphi 0, %s194
      %s198 = sphi 0, %s197
      %s214 = sphi 0, %s198
    $region4: #{tpu_custom_call.1} parent=1 // loop_header_branch
      %26 = sbr.rel (%p24) target = $region8
    $region5: #{tpu_custom_call.1} parent=1 // loop_body
      %s28 = ssub.s32 %s23, 1
      %s29 = ssub.s32 %s23, 2
      %s36 = sadd.s32 1, %s31
      %p37 = scmp.ge.s32.totalorder %s36, 1
      %s38 = scalar_select %p37, 0, %s36
      %s39 = sadd.s32 1, %s30
      %s40 = scalar_select %p37, %s39, %s30
      %p41 = scmp.ge.s32.totalorder %s40, 3
      %s42 = scalar_select %p41, 0, %s40
      %s43 = ssub.s32 %s30, %s42
      %s44 = ssub.s32 %s31, %s38
      %s45 = sor.u32 %s43, %s44
      %p46 = scmp.eq.s32.totalorder %s45, 0
      %s48 = sadd.s32 %s47, 1
      %s49 = scalar_select %p46, %s47, %s48
      %p52 = pneg %p46
      %p53 = scmp.eq.s32.totalorder %s23, 2
      %p54 = por %p52, %p53
      %p55 = scmp.ne.s32.totalorder %s47, %s50
      %p56 = scmp.eq.s32.totalorder %s23, 0
      %p57 = por %p55, %p56
      %p58 = scmp.ne.s32.totalorder %s47, %s50
      %p59 = scmp.eq.s32.totalorder %s28, 2
      %p60 = por %p58, %p59
      %p61 = scmp.ne.s32.totalorder %s50, %s51
      %p62 = scmp.eq.s32.totalorder %s28, 0
      %p63 = por %p61, %p62
      %p64 = scmp.ne.s32.totalorder %s50, %s51
      %p65 = scmp.eq.s32.totalorder %s29, 2
      %p66 = por %p64, %p65
      %p68 = scmp.ne.s32.totalorder %s51, %s67
      %p69 = scmp.eq.s32.totalorder %s29, 0
      %p70 = por %p68, %p69
      %s72 = sadd.s32 %s71, 1
      %p75 = scmp.eq.s32.totalorder %s23, 2
      %p76 = scmp.ne.s32.totalorder %s71, %s73
      %p77 = scmp.eq.s32.totalorder %s23, 0
      %p78 = por %p76, %p77
      %p79 = scmp.ne.s32.totalorder %s71, %s73
      %p80 = scmp.eq.s32.totalorder %s28, 2
      %p81 = por %p79, %p80
      %p82 = scmp.ne.s32.totalorder %s73, %s74
      %p83 = scmp.eq.s32.totalorder %s28, 0
      %p84 = por %p82, %p83
      %p85 = scmp.ne.s32.totalorder %s73, %s74
      %p86 = scmp.eq.s32.totalorder %s29, 2
      %p87 = por %p85, %p86
      %p89 = scmp.ne.s32.totalorder %s74, %s88
      %p90 = scmp.eq.s32.totalorder %s29, 0
      %p91 = por %p89, %p90
      %s93 = sadd.s32 %s92, 1
      %p96 = scmp.eq.s32.totalorder %s23, 2
      %p97 = scmp.ne.s32.totalorder %s92, %s94
      %p98 = scmp.eq.s32.totalorder %s23, 0
      %p99 = por %p97, %p98
      %p100 = scmp.ne.s32.totalorder %s92, %s94
      %p101 = scmp.eq.s32.totalorder %s28, 2
      %p102 = por %p100, %p101
      %p103 = scmp.ne.s32.totalorder %s94, %s95
      %p104 = scmp.eq.s32.totalorder %s28, 0
      %p105 = por %p103, %p104
      %p106 = scmp.ne.s32.totalorder %s94, %s95
      %p107 = scmp.eq.s32.totalorder %s29, 2
      %p108 = por %p106, %p107
      %p110 = scmp.ne.s32.totalorder %s95, %s109
      %p111 = scmp.eq.s32.totalorder %s29, 0
      %p112 = por %p110, %p111
      %s114 = sadd.s32 %s113, 1
      %p117 = scmp.eq.s32.totalorder %s23, 2
      %p118 = scmp.ne.s32.totalorder %s113, %s115
      %p119 = scmp.eq.s32.totalorder %s23, 0
      %p120 = por %p118, %p119
      %p121 = scmp.ne.s32.totalorder %s113, %s115
      %p122 = scmp.eq.s32.totalorder %s28, 2
      %p123 = por %p121, %p122
      %p124 = scmp.ne.s32.totalorder %s115, %s116
      %p125 = scmp.eq.s32.totalorder %s28, 0
      %p126 = por %p124, %p125
      %p127 = scmp.ne.s32.totalorder %s115, %s116
      %p128 = scmp.eq.s32.totalorder %s29, 2
      %p129 = por %p127, %p128
      %p131 = scmp.ne.s32.totalorder %s116, %s130
      %p132 = scmp.eq.s32.totalorder %s29, 0
      %p133 = por %p131, %p132
      %s134 = ssub.s32 %s30, %s42
      %s135 = ssub.s32 %s31, %s38
      %s136 = sor.u32 %s134, %s135
      %p137 = scmp.eq.s32.totalorder %s136, 0
      %s139 = sadd.s32 %s138, 1
      %s140 = scalar_select %p137, %s138, %s139
      %p143 = pneg %p137
      %p144 = scmp.eq.s32.totalorder %s23, 2
      %p145 = por %p143, %p144
      %p146 = scmp.ne.s32.totalorder %s138, %s141
      %p147 = scmp.eq.s32.totalorder %s23, 0
      %p148 = por %p146, %p147
      %p149 = scmp.ne.s32.totalorder %s138, %s141
      %p150 = scmp.eq.s32.totalorder %s28, 2
      %p151 = por %p149, %p150
      %p152 = scmp.ne.s32.totalorder %s141, %s142
      %p153 = scmp.eq.s32.totalorder %s28, 0
      %p154 = por %p152, %p153
      %p155 = scmp.ne.s32.totalorder %s141, %s142
      %p156 = scmp.eq.s32.totalorder %s29, 2
      %p157 = por %p155, %p156
      %p159 = scmp.ne.s32.totalorder %s142, %s158
      %p160 = scmp.eq.s32.totalorder %s29, 0
      %p161 = por %p159, %p160
      %s162 = ssub.s32 %s30, %s42
      %s163 = ssub.s32 %s31, %s38
      %s164 = sor.u32 %s162, %s163
      %p165 = scmp.eq.s32.totalorder %s164, 0
      %s167 = sadd.s32 %s166, 1
      %s168 = scalar_select %p165, %s166, %s167
      %p171 = pneg %p165
      %p172 = scmp.eq.s32.totalorder %s23, 2
      %p173 = por %p171, %p172
      %p174 = scmp.ne.s32.totalorder %s166, %s169
      %p175 = scmp.eq.s32.totalorder %s23, 0
      %p176 = por %p174, %p175
      %p177 = scmp.ne.s32.totalorder %s166, %s169
      %p178 = scmp.eq.s32.totalorder %s28, 2
      %p179 = por %p177, %p178
      %p180 = scmp.ne.s32.totalorder %s169, %s170
      %p181 = scmp.eq.s32.totalorder %s28, 0
      %p182 = por %p180, %p181
      %p183 = scmp.ne.s32.totalorder %s169, %s170
      %p184 = scmp.eq.s32.totalorder %s29, 2
      %p185 = por %p183, %p184
      %p187 = scmp.ne.s32.totalorder %s170, %s186
      %p188 = scmp.eq.s32.totalorder %s29, 0
      %p189 = por %p187, %p188
      %s190 = ssub.s32 %s30, %s42
      %s191 = ssub.s32 %s31, %s38
      %s192 = sor.u32 %s190, %s191
      %p193 = scmp.eq.s32.totalorder %s192, 0
      %s195 = sadd.s32 %s194, 1
      %s196 = scalar_select %p193, %s194, %s195
      %p199 = pneg %p193
      %p200 = scmp.eq.s32.totalorder %s23, 2
      %p201 = por %p199, %p200
      %p202 = scmp.ne.s32.totalorder %s194, %s197
      %p203 = scmp.eq.s32.totalorder %s23, 0
      %p204 = por %p202, %p203
      %p205 = scmp.ne.s32.totalorder %s194, %s197
      %p206 = scmp.eq.s32.totalorder %s28, 2
      %p207 = por %p205, %p206
      %p208 = scmp.ne.s32.totalorder %s197, %s198
      %p209 = scmp.eq.s32.totalorder %s28, 0
      %p210 = por %p208, %p209
      %p211 = scmp.ne.s32.totalorder %s197, %s198
      %p212 = scmp.eq.s32.totalorder %s29, 2
      %p213 = por %p211, %p212
      %p215 = scmp.ne.s32.totalorder %s198, %s214
      %p216 = scmp.eq.s32.totalorder %s29, 0
      %p217 = por %p215, %p216
      %p218 = scmp.le.s32.totalorder 1, %s23
      %p219 = scmp.lt.s32.totalorder %s23, 4
      %p220 = pnand %p218, %p219
      %p221 = pneg %p220
      // Predicated region
      $region9: #{tpu_custom_call.1} parent=5 // pred_check
        _
      $region10: #{tpu_custom_call.1} parent=5 // pred_check_branch
        %223 = sbr.rel (%p220) target = $region12
      $region11: #{tpu_custom_call.1} parent=5 // pred_region
        %s224 = ssub.s32 %s23, 1
        // Predicated region
        $region13: #{tpu_custom_call.1} parent=11 // pred_check
          %p225 = pneg %p84
        $region14: #{tpu_custom_call.1} parent=11 // pred_check_branch
          %227 = sbr.rel (%p225) target = $region16
        $region15: #{tpu_custom_call.1} parent=11 // pred_region
          %s229 = ssub.s32 128, 128
          %230 = vsyncadd [#allocation6], %s229
          %s232 = sshll.u32 [#allocation5], 4
          %s233 = int_to_ptr.vmem [resolvable:$true] %s232
          %235 = dma.hbm_to_vmem [thread:$0]  %s1, 128, %s233, [#allocation6]
        $region16: #{tpu_custom_call.1} parent=11 // pred_fallthru
          _
        // Predicated region
        $region17: #{tpu_custom_call.1} parent=11 // pred_check
          %p236 = pneg %p105
        $region18: #{tpu_custom_call.1} parent=11 // pred_check_branch
          %238 = sbr.rel (%p236) target = $region20
        $region19: #{tpu_custom_call.1} parent=11 // pred_region
          %s240 = ssub.s32 128, 128
          %241 = vsyncadd [#allocation6], %s240
          %s243 = sshll.u32 [#allocation7], 4
          %s244 = int_to_ptr.vmem [resolvable:$true] %s243
          %246 = dma.hbm_to_vmem [thread:$0]  %s2, 128, %s244, [#allocation6]
        $region20: #{tpu_custom_call.1} parent=11 // pred_fallthru
          _
        // Predicated region
        $region21: #{tpu_custom_call.1} parent=11 // pred_check
          %p247 = pneg %p126
        $region22: #{tpu_custom_call.1} parent=11 // pred_check_branch
          %249 = sbr.rel (%p247) target = $region24
        $region23: #{tpu_custom_call.1} parent=11 // pred_region
          _
        $region24: #{tpu_custom_call.1} parent=11 // pred_fallthru
          _
      $region12: #{tpu_custom_call.1} parent=5 // pred_fallthru
        _
      %p250 = scmp.lt.s32.totalorder %s23, 3
      // Predicated region
      $region25: #{tpu_custom_call.1} parent=5 // pred_check
        %p251 = pneg %p250
      $region26: #{tpu_custom_call.1} parent=5 // pred_check_branch
        %253 = sbr.rel (%p251) target = $region28
      $region27: #{tpu_custom_call.1} parent=5 // pred_region
        // Predicated region
        $region29: #{tpu_custom_call.1} parent=27 // pred_check
          %p254 = pneg %p57
        $region30: #{tpu_custom_call.1} parent=27 // pred_check_branch
          %256 = sbr.rel (%p254) target = $region32
        $region31: #{tpu_custom_call.1} parent=27 // pred_region
          %s257 = sand.u32 %s47, 1
          %s258 = scalar_lea.sflag [#allocation3], %s257
          %s259 = sand.u32 %s47, 1
          %s260 = smul.addr %s259, 8
          %s261 = scalar_lea.vmem [#allocation2], %s260
          %s263 = ssub.s32 128, 128
          %264 = vsyncadd %s258, %s263
          %s265 = sadd.s32 %s31, %s30
          %s266 = smul.addr %s265, 128
          %s267 = scalar_lea.hbm %s0, %s266
          %s269 = sshll.u32 %s261, 4
          %s270 = int_to_ptr.vmem [resolvable:$true] %s269
          %272 = dma.hbm_to_vmem [thread:$0]  %s267, 128, %s270, %s258
        $region32: #{tpu_custom_call.1} parent=27 // pred_fallthru
          _
      $region28: #{tpu_custom_call.1} parent=5 // pred_fallthru
        _
      %p273 = scmp.le.s32.totalorder 1, %s23
      %p274 = scmp.lt.s32.totalorder %s23, 4
      %p275 = pnand %p273, %p274
      %p276 = pneg %p275
      // Predicated region
      $region33: #{tpu_custom_call.1} parent=5 // pred_check
        _
      $region34: #{tpu_custom_call.1} parent=5 // pred_check_branch
        %278 = sbr.rel (%p275) target = $region36
      $region35: #{tpu_custom_call.1} parent=5 // pred_region
        %s279 = ssub.s32 %s23, 1
        %s280 = sand.u32 %s50, 1
        %s281 = scalar_lea.sflag [#allocation3], %s280
        %s282 = sand.u32 %s50, 1
        %s283 = smul.addr %s282, 8
        %s284 = scalar_lea.vmem [#allocation2], %s283
        // Predicated region
        $region37: #{tpu_custom_call.1} parent=35 // pred_check
          %p285 = pneg %p63
        $region38: #{tpu_custom_call.1} parent=35 // pred_check_branch
          %287 = sbr.rel (%p285) target = $region40
        $region39: #{tpu_custom_call.1} parent=35 // pred_region
          %288 = dma.done %s281, 128
        $region40: #{tpu_custom_call.1} parent=35 // pred_fallthru
          _
        // Predicated region
        $region41: #{tpu_custom_call.1} parent=35 // pred_check
          %p289 = pneg %p84
        $region42: #{tpu_custom_call.1} parent=35 // pred_check_branch
          %291 = sbr.rel (%p289) target = $region44
        $region43: #{tpu_custom_call.1} parent=35 // pred_region
          %292 = dma.done [#allocation6], 128
        $region44: #{tpu_custom_call.1} parent=35 // pred_fallthru
          _
        // Predicated region
        $region45: #{tpu_custom_call.1} parent=35 // pred_check
          %p293 = pneg %p105
        $region46: #{tpu_custom_call.1} parent=35 // pred_check_branch
          %295 = sbr.rel (%p293) target = $region48
        $region47: #{tpu_custom_call.1} parent=35 // pred_region
          %296 = dma.done [#allocation6], 128
        $region48: #{tpu_custom_call.1} parent=35 // pred_fallthru
          _
        %s297 = sand.u32 %s50, 1
        %s298 = scalar_lea.sflag [#allocation3], %s297
        %s299 = sand.u32 %s50, 1
        %s300 = smul.addr %s299, 8
        %s301 = scalar_lea.vmem [#allocation2], %s300
        %p302 = pneg %p63
        %p303 = pneg %p60
        %p304 = pneg %p84
        %p305 = pneg %p81
        %p306 = pneg %p105
        %p307 = pneg %p102
        %p308 = pneg %p126
        %p309 = pneg %p123
        %p310 = pneg %p154
        %p311 = pneg %p151
        %s312 = sand.u32 %s141, 1
        %s313 = scalar_lea.sflag [#allocation4], %s312
        %s314 = sand.u32 %s141, 1
        %s315 = smul.addr %s314, 8
        %s316 = scalar_lea.vmem [#allocation8], %s315
        %p317 = pneg %p182
        %p318 = pneg %p179
        %s319 = sand.u32 %s28, 1
        %s320 = scalar_lea.sflag [#allocation10], %s319
        %s321 = sand.u32 %s169, 1
        %s322 = smul.addr %s321, 8
        %s323 = scalar_lea.vmem [#allocation9], %s322
        %p324 = pneg %p210
        %p325 = pneg %p207
        %s326 = sand.u32 %s28, 1
        %s327 = scalar_lea.sflag [#allocation10], %s326
        %s328 = sand.u32 %s197, 1
        %s329 = smul.addr %s328, 8
        %s330 = scalar_lea.vmem [#allocation11], %s329
        %v331 = vld [vmem:[%s284] sm:$0xff]
        %v332 = vld [vmem:[#allocation5] sm:$0x3f]
        %vm333 = vcmask 48128
        %v335 = vsel %vm333, %v331, 0
        %vm337 = vcmask 1045504
        %v339 = vsel %vm337, %v332, 0
        %341 = vmatprep.subr.mxu0 0.0
        %342 = vmatpush1.msra.mxu0 %v339
        %343 = vmatprep.subr.mxu0 0.0
        %344 = vmatpush1.msra.mxu0 0.0
        %345 = vmatprep.subr.mxu0 0.0
        %346 = vmatpush1.msra.mxu0 0.0
        %347 = vmatprep.subr.mxu0 0.0
        %348 = vmatpush1.msra.mxu0 0.0
        %349 = vmatprep.subr.mxu0 0.0
        %350 = vmatpush1.msra.mxu0 0.0
        %351 = vmatprep.subr.mxu0 0.0
        %352 = vmatpush1.msra.mxu0 0.0
        %353 = vmatprep.subr.mxu0 0.0
        %354 = vmatpush1.msra.mxu0 0.0
        %355 = vmatprep.subr.mxu0 0.0
        %356 = vmatpush1.msra.mxu0 0.0
        %357 = vmatprep.subr.mxu0 0.0
        %358 = vmatpush1.msra.mxu0 0.0
        %359 = vmatprep.subr.mxu0 0.0
        %360 = vmatpush1.msra.mxu0 0.0
        %361 = vmatprep.subr.mxu0 0.0
        %362 = vmatpush1.msra.mxu0 0.0
        %363 = vmatprep.subr.mxu0 0.0
        %364 = vmatpush1.msra.mxu0 0.0
        %365 = vmatprep.subr.mxu0 0.0
        %366 = vmatpush1.msra.mxu0 0.0
        %367 = vmatprep.subr.mxu0 0.0
        %368 = vmatpush1.msra.mxu0 0.0
        %369 = vmatprep.subr.mxu0 0.0
        %370 = vmatpush1.msra.mxu0 0.0
        %371 = vmatprep.subr.mxu0 0.0
        %372 = vmatpush1.msra.mxu0 0.0
        %373 = vmatprep.subr.mxu0 0.0
        %374 = vmatpush1.msra.mxu0 0.0
        %375 = vmatprep.subr.mxu0 0.0
        %376 = vmatpush1.msra.mxu0 0.0
        %377 = vmatprep.subr.mxu0 0.0
        %378 = vmatpush1.msra.mxu0 0.0
        %379 = vmatprep.subr.mxu0 0.0
        %380 = vmatpush1.msra.mxu0 0.0
        %381 = vmatprep.subr.mxu0 0.0
        %382 = vmatpush1.msra.mxu0 0.0
        %383 = vmatprep.subr.mxu0 0.0
        %384 = vmatpush1.msra.mxu0 0.0
        %385 = vmatprep.subr.mxu0 0.0
        %386 = vmatpush1.msra.mxu0 0.0
        %387 = vmatprep.subr.mxu0 0.0
        %388 = vmatpush1.msra.mxu0 0.0
        %389 = vmatprep.subr.mxu0 0.0
        %390 = vmatpush1.msra.mxu0 0.0
        %391 = vmatprep.subr.mxu0 0.0
        %392 = vmatpush1.msra.mxu0 0.0
        %393 = vmatprep.subr.mxu0 0.0
        %394 = vmatpush1.msra.mxu0 0.0
        %395 = vmatprep.subr.mxu0 0.0
        %396 = vmatpush1.msra.mxu0 0.0
        %397 = vmatprep.subr.mxu0 0.0
        %398 = vmatpush1.msra.mxu0 0.0
        %399 = vmatprep.subr.mxu0 0.0
        %400 = vmatpush1.msra.mxu0 0.0
        %401 = vmatprep.subr.mxu0 0.0
        %402 = vmatpush1.msra.mxu0 0.0
        %403 = vmatprep.subr.mxu0 0.0
        %404 = vmatpush1.msra.mxu0 0.0
        %405 = vmatprep.mubr.f32.mxu0 0.0
        %406 = vmatmul.mubr.f32.gmra.mrb[0].mxu0 %v335
        %v407 = vpop.f32.mrb[0].mxu0
        %v408 = vadd.f32 0.0, %v407
        %v409 = vpop.f32.mrb[0].mxu0
        %410 = vdwg.mxu0
        %v411 = vld [vmem:[#allocation7] sm:$0x3f]
        %v413 = vsel %vm337, %v411, 0
        %415 = vmatprep.subr.mxu0 0.0
        %416 = vmatpush1.msra.mxu0 %v413
        %417 = vmatprep.subr.mxu0 0.0
        %418 = vmatpush1.msra.mxu0 0.0
        %419 = vmatprep.subr.mxu0 0.0
        %420 = vmatpush1.msra.mxu0 0.0
        %421 = vmatprep.subr.mxu0 0.0
        %422 = vmatpush1.msra.mxu0 0.0
        %423 = vmatprep.subr.mxu0 0.0
        %424 = vmatpush1.msra.mxu0 0.0
        %425 = vmatprep.subr.mxu0 0.0
        %426 = vmatpush1.msra.mxu0 0.0
        %427 = vmatprep.subr.mxu0 0.0
        %428 = vmatpush1.msra.mxu0 0.0
        %429 = vmatprep.subr.mxu0 0.0
        %430 = vmatpush1.msra.mxu0 0.0
        %431 = vmatprep.subr.mxu0 0.0
        %432 = vmatpush1.msra.mxu0 0.0
        %433 = vmatprep.subr.mxu0 0.0
        %434 = vmatpush1.msra.mxu0 0.0
        %435 = vmatprep.subr.mxu0 0.0
        %436 = vmatpush1.msra.mxu0 0.0
        %437 = vmatprep.subr.mxu0 0.0
        %438 = vmatpush1.msra.mxu0 0.0
        %439 = vmatprep.subr.mxu0 0.0
        %440 = vmatpush1.msra.mxu0 0.0
        %441 = vmatprep.subr.mxu0 0.0
        %442 = vmatpush1.msra.mxu0 0.0
        %443 = vmatprep.subr.mxu0 0.0
        %444 = vmatpush1.msra.mxu0 0.0
        %445 = vmatprep.subr.mxu0 0.0
        %446 = vmatpush1.msra.mxu0 0.0
        %447 = vmatprep.subr.mxu0 0.0
        %448 = vmatpush1.msra.mxu0 0.0
        %449 = vmatprep.subr.mxu0 0.0
        %450 = vmatpush1.msra.mxu0 0.0
        %451 = vmatprep.subr.mxu0 0.0
        %452 = vmatpush1.msra.mxu0 0.0
        %453 = vmatprep.subr.mxu0 0.0
        %454 = vmatpush1.msra.mxu0 0.0
        %455 = vmatprep.subr.mxu0 0.0
        %456 = vmatpush1.msra.mxu0 0.0
        %457 = vmatprep.subr.mxu0 0.0
        %458 = vmatpush1.msra.mxu0 0.0
        %459 = vmatprep.subr.mxu0 0.0
        %460 = vmatpush1.msra.mxu0 0.0
        %461 = vmatprep.subr.mxu0 0.0
        %462 = vmatpush1.msra.mxu0 0.0
        %463 = vmatprep.subr.mxu0 0.0
        %464 = vmatpush1.msra.mxu0 0.0
        %465 = vmatprep.subr.mxu0 0.0
        %466 = vmatpush1.msra.mxu0 0.0
        %467 = vmatprep.subr.mxu0 0.0
        %468 = vmatpush1.msra.mxu0 0.0
        %469 = vmatprep.subr.mxu0 0.0
        %470 = vmatpush1.msra.mxu0 0.0
        %471 = vmatprep.subr.mxu0 0.0
        %472 = vmatpush1.msra.mxu0 0.0
        %473 = vmatprep.subr.mxu0 0.0
        %474 = vmatpush1.msra.mxu0 0.0
        %475 = vmatprep.subr.mxu0 0.0
        %476 = vmatpush1.msra.mxu0 0.0
        %477 = vmatprep.subr.mxu0 0.0
        %478 = vmatpush1.msra.mxu0 0.0
        %479 = vmatprep.mubr.f32.mxu0 0.0
        %480 = vmatmul.mubr.f32.gmra.mrb[0].mxu0 %v335
        %v481 = vpop.f32.mrb[0].mxu0
        %v482 = vadd.f32 0.0, %v481
        %v483 = vpop.f32.mrb[0].mxu0
        %484 = vdwg.mxu0
        %v485 = vld [vmem:[%s3] sm:$0x3f]
        %v487 = vsel %vm337, %v485, 0
        %489 = vmatprep.subr.mxu0 0.0
        %490 = vmatpush1.msra.mxu0 %v487
        %491 = vmatprep.subr.mxu0 0.0
        %492 = vmatpush1.msra.mxu0 0.0
        %493 = vmatprep.subr.mxu0 0.0
        %494 = vmatpush1.msra.mxu0 0.0
        %495 = vmatprep.subr.mxu0 0.0
        %496 = vmatpush1.msra.mxu0 0.0
        %497 = vmatprep.subr.mxu0 0.0
        %498 = vmatpush1.msra.mxu0 0.0
        %499 = vmatprep.subr.mxu0 0.0
        %500 = vmatpush1.msra.mxu0 0.0
        %501 = vmatprep.subr.mxu0 0.0
        %502 = vmatpush1.msra.mxu0 0.0
        %503 = vmatprep.subr.mxu0 0.0
        %504 = vmatpush1.msra.mxu0 0.0
        %505 = vmatprep.subr.mxu0 0.0
        %506 = vmatpush1.msra.mxu0 0.0
        %507 = vmatprep.subr.mxu0 0.0
        %508 = vmatpush1.msra.mxu0 0.0
        %509 = vmatprep.subr.mxu0 0.0
        %510 = vmatpush1.msra.mxu0 0.0
        %511 = vmatprep.subr.mxu0 0.0
        %512 = vmatpush1.msra.mxu0 0.0
        %513 = vmatprep.subr.mxu0 0.0
        %514 = vmatpush1.msra.mxu0 0.0
        %515 = vmatprep.subr.mxu0 0.0
        %516 = vmatpush1.msra.mxu0 0.0
        %517 = vmatprep.subr.mxu0 0.0
        %518 = vmatpush1.msra.mxu0 0.0
        %519 = vmatprep.subr.mxu0 0.0
        %520 = vmatpush1.msra.mxu0 0.0
        %521 = vmatprep.subr.mxu0 0.0
        %522 = vmatpush1.msra.mxu0 0.0
        %523 = vmatprep.subr.mxu0 0.0
        %524 = vmatpush1.msra.mxu0 0.0
        %525 = vmatprep.subr.mxu0 0.0
        %526 = vmatpush1.msra.mxu0 0.0
        %527 = vmatprep.subr.mxu0 0.0
        %528 = vmatpush1.msra.mxu0 0.0
        %529 = vmatprep.subr.mxu0 0.0
        %530 = vmatpush1.msra.mxu0 0.0
        %531 = vmatprep.subr.mxu0 0.0
        %532 = vmatpush1.msra.mxu0 0.0
        %533 = vmatprep.subr.mxu0 0.0
        %534 = vmatpush1.msra.mxu0 0.0
        %535 = vmatprep.subr.mxu0 0.0
        %536 = vmatpush1.msra.mxu0 0.0
        %537 = vmatprep.subr.mxu0 0.0
        %538 = vmatpush1.msra.mxu0 0.0
        %539 = vmatprep.subr.mxu0 0.0
        %540 = vmatpush1.msra.mxu0 0.0
        %541 = vmatprep.subr.mxu0 0.0
        %542 = vmatpush1.msra.mxu0 0.0
        %543 = vmatprep.subr.mxu0 0.0
        %544 = vmatpush1.msra.mxu0 0.0
        %545 = vmatprep.subr.mxu0 0.0
        %546 = vmatpush1.msra.mxu0 0.0
        %547 = vmatprep.subr.mxu0 0.0
        %548 = vmatpush1.msra.mxu0 0.0
        %549 = vmatprep.subr.mxu0 0.0
        %550 = vmatpush1.msra.mxu0 0.0
        %551 = vmatprep.subr.mxu0 0.0
        %552 = vmatpush1.msra.mxu0 0.0
        %553 = vmatprep.mubr.f32.mxu0 0.0
        %554 = vmatmul.mubr.f32.gmra.mrb[0].mxu0 %v335
        %v555 = vpop.f32.mrb[0].mxu0
        %v556 = vadd.f32 0.0, %v555
        %v557 = vpop.f32.mrb[0].mxu0
        %558 = vdwg.mxu0
        %v559 = vmul.f32 %v408, 0.37796447
        %vm560 = vcmask 56320
        %561 = vst.msk [vmem:[%s316] sm:$0xff] %vm560, %v559
        %562 = vst.msk [vmem:[%s323] sm:$0xff] %vm560, %v482
        %vm563 = vcmask 64512
        %564 = vst.msk [vmem:[%s330] sm:$0xff] %vm563, %v556
        %s565 = sand.u32 %s141, 1
        %s566 = scalar_lea.sflag [#allocation4], %s565
        %s567 = sand.u32 %s141, 1
        %s568 = smul.addr %s567, 8
        %s569 = scalar_lea.vmem [#allocation8], %s568
        %s570 = sand.u32 %s28, 1
        %s571 = scalar_lea.sflag [#allocation10], %s570
        %s572 = sand.u32 %s169, 1
        %s573 = smul.addr %s572, 8
        %s574 = scalar_lea.vmem [#allocation9], %s573
        %s575 = sand.u32 %s28, 1
        %s576 = scalar_lea.sflag [#allocation10], %s575
        %s577 = sand.u32 %s197, 1
        %s578 = smul.addr %s577, 8
        %s579 = scalar_lea.vmem [#allocation11], %s578
        // Predicated region
        $region49: #{tpu_custom_call.1} parent=35 // pred_check
          %p580 = pneg %p151
        $region50: #{tpu_custom_call.1} parent=35 // pred_check_branch
          %582 = sbr.rel (%p580) target = $region52
        $region51: #{tpu_custom_call.1} parent=35 // pred_region
          %s584 = ssub.s32 128, 128
          %585 = vsyncadd %s566, %s584
          %s586 = sadd.s32 %s33, %s32
          %s587 = smul.addr %s586, 128
          %s588 = scalar_lea.hbm %s4, %s587
          %s590 = sshll.u32 %s569, 4
          %s591 = int_to_ptr.vmem [resolvable:$true] %s590
          %593 = dma.vmem_to_hbm [thread:$0]  %s591, 128, %s588, %s566
        $region52: #{tpu_custom_call.1} parent=35 // pred_fallthru
          _
        // Predicated region
        $region53: #{tpu_custom_call.1} parent=35 // pred_check
          %p594 = pneg %p179
        $region54: #{tpu_custom_call.1} parent=35 // pred_check_branch
          %596 = sbr.rel (%p594) target = $region56
        $region55: #{tpu_custom_call.1} parent=35 // pred_region
          %s598 = ssub.s32 128, 128
          %599 = vsyncadd %s571, %s598
          %s600 = sadd.s32 %s33, %s32
          %s601 = smul.addr %s600, 128
          %s602 = scalar_lea.hbm %s5, %s601
          %s604 = sshll.u32 %s574, 4
          %s605 = int_to_ptr.vmem [resolvable:$true] %s604
          %607 = dma.vmem_to_hbm [thread:$0]  %s605, 128, %s602, %s571
        $region56: #{tpu_custom_call.1} parent=35 // pred_fallthru
          _
        // Predicated region
        $region57: #{tpu_custom_call.1} parent=35 // pred_check
          %p608 = pneg %p207
        $region58: #{tpu_custom_call.1} parent=35 // pred_check_branch
          %610 = sbr.rel (%p608) target = $region60
        $region59: #{tpu_custom_call.1} parent=35 // pred_region
          %s612 = ssub.s32 128, 128
          %613 = vsyncadd %s576, %s612
          %s614 = sadd.s32 %s33, %s32
          %s615 = smul.addr %s614, 128
          %s616 = scalar_lea.hbm %s6, %s615
          %s618 = sshll.u32 %s579, 4
          %s619 = int_to_ptr.vmem [resolvable:$true] %s618
          %621 = dma.vmem_to_hbm [thread:$0]  %s619, 128, %s616, %s576
        $region60: #{tpu_custom_call.1} parent=35 // pred_fallthru
          _
      $region36: #{tpu_custom_call.1} parent=5 // pred_fallthru
        _
      %p622 = scmp.le.s32.totalorder 2, %s23
      // Predicated region
      $region61: #{tpu_custom_call.1} parent=5 // pred_check
        %p623 = pneg %p622
      $region62: #{tpu_custom_call.1} parent=5 // pred_check_branch
        %625 = sbr.rel (%p623) target = $region64
      $region63: #{tpu_custom_call.1} parent=5 // pred_region
        %s626 = ssub.s32 %s23, 2
        // Predicated region
        $region65: #{tpu_custom_call.1} parent=63 // pred_check
          %p627 = pneg %p157
        $region66: #{tpu_custom_call.1} parent=63 // pred_check_branch
          %629 = sbr.rel (%p627) target = $region68
        $region67: #{tpu_custom_call.1} parent=63 // pred_region
          %s630 = sand.u32 %s142, 1
          %s631 = scalar_lea.sflag [#allocation4], %s630
          %s632 = sand.u32 %s142, 1
          %s633 = smul.addr %s632, 8
          %s634 = scalar_lea.vmem [#allocation8], %s633
          %635 = dma.done %s631, 128
        $region68: #{tpu_custom_call.1} parent=63 // pred_fallthru
          _
        // Predicated region
        $region69: #{tpu_custom_call.1} parent=63 // pred_check
          %p636 = pneg %p185
        $region70: #{tpu_custom_call.1} parent=63 // pred_check_branch
          %638 = sbr.rel (%p636) target = $region72
        $region71: #{tpu_custom_call.1} parent=63 // pred_region
          %s639 = sand.u32 %s29, 1
          %s640 = scalar_lea.sflag [#allocation10], %s639
          %s641 = sand.u32 %s170, 1
          %s642 = smul.addr %s641, 8
          %s643 = scalar_lea.vmem [#allocation9], %s642
          %644 = dma.done %s640, 128
        $region72: #{tpu_custom_call.1} parent=63 // pred_fallthru
          _
        // Predicated region
        $region73: #{tpu_custom_call.1} parent=63 // pred_check
          %p645 = pneg %p213
        $region74: #{tpu_custom_call.1} parent=63 // pred_check_branch
          %647 = sbr.rel (%p645) target = $region76
        $region75: #{tpu_custom_call.1} parent=63 // pred_region
          %s648 = sand.u32 %s29, 1
          %s649 = scalar_lea.sflag [#allocation10], %s648
          %s650 = sand.u32 %s198, 1
          %s651 = smul.addr %s650, 8
          %s652 = scalar_lea.vmem [#allocation11], %s651
          %653 = dma.done %s649, 128
        $region76: #{tpu_custom_call.1} parent=63 // pred_fallthru
          _
      $region64: #{tpu_custom_call.1} parent=5 // pred_fallthru
        _
    $region6: #{tpu_custom_call.1} parent=1 // loop_footer
      %s27 = sadd.s32 1, %s23
    $region7: #{tpu_custom_call.1} parent=1 // loop_footer_branch
      %22 = sbr.rel target = $region3
    $region8: #{tpu_custom_call.1} parent=1 // loop_exit
      _
    %654 = vsyncpa [#allocation3], 1
    %s655 = scalar_lea.sflag [#allocation3], 1
    %656 = vsyncpa %s655, 1
    %657 = vsyncpa [#allocation6], 1
    %658 = vsyncpa [#allocation4], 1
    %s659 = scalar_lea.sflag [#allocation4], 1
    %660 = vsyncpa %s659, 1
    %661 = vsyncpa [#allocation10], 1
    %s662 = scalar_lea.sflag [#allocation10], 1
    %663 = vsyncpa %s662, 1

</llo_original>
